<compile_context>
chip_gen: v6e
topology: v6e:2x2x1
jax: 0.10.0
libtpu: 0.0.40
codegen_flags: <defaults>
</compile_context>

<pallas_src>
import math
from functools import partial

import jax
import jax.numpy as jnp
from jax import lax
from jax.experimental import pallas as pl
from jax.experimental.pallas import tpu as pltpu


_INV_SQRT2 = 1.0 / math.sqrt(2.0)
_SQRT_2_OVER_PI = math.sqrt(2.0 / math.pi)

# Contract dim 1 of both operands: x(bm,D) . W(out,D) -> (bm,out), i.e. x @ W.T with the
# weights kept in PyTorch (out, in) layout — no transpose copy in HBM.
_CONTRACT_LAST = (((1,), (1,)), ((), ()))


def _gelu_f32(h, approximate):
    if approximate:
        # tanh approximation routes the transcendental to the EUP slot (off the VALU path).
        return 0.5 * h * (1.0 + jnp.tanh(_SQRT_2_OVER_PI * (h + 0.044715 * h * h * h)))
    # Exact GELU (PyTorch nn.GELU default, approximate='none').
    return 0.5 * h * (1.0 + lax.erf(h * _INV_SQRT2))


def _tile_ffn(x_ref, w1_ref, b1_ref, w2_ref, approximate):
    """One hidden-column tile: GELU(x @ W1[k].T + b1[k]) @ W2[:, k].T -> (bm, D) f32."""
    cd = w1_ref.dtype  # MXU operand dtype (bf16 by default)
    h = lax.dot_general(x_ref[...].astype(cd), w1_ref[...], _CONTRACT_LAST,
                        preferred_element_type=jnp.float32)
    h = _gelu_f32(h + b1_ref[...].astype(jnp.float32), approximate)
    return lax.dot_general(h.astype(cd), w2_ref[...], _CONTRACT_LAST,
                           preferred_element_type=jnp.float32)


def _ffn_kernel_single(x_ref, w1_ref, b1_ref, w2_ref, b2_ref, o_ref, *, approximate):
    # Single hidden tile: no accumulator needed at all.
    y = _tile_ffn(x_ref, w1_ref, b1_ref, w2_ref, approximate)
    o_ref[...] = (y + b2_ref[...].astype(jnp.float32)).astype(o_ref.dtype)


def _ffn_kernel_acc_out(x_ref, w1_ref, b1_ref, w2_ref, b2_ref, o_ref, *, approximate):
    # Multi-k, f32 output: accumulate directly into the resident output tile (no scratch).
    k = pl.program_id(1)

    @pl.when(k == 0)
    def _():
        o_ref[...] = jnp.zeros_like(o_ref)

    o_ref[...] += _tile_ffn(x_ref, w1_ref, b1_ref, w2_ref, approximate)

    @pl.when(k == pl.num_programs(1) - 1)
    def _():
        o_ref[...] += b2_ref[...].astype(o_ref.dtype)


def _ffn_kernel_scratch(x_ref, w1_ref, b1_ref, w2_ref, b2_ref, o_ref, acc_ref, *, approximate):
    # Multi-k, low-precision output: f32 accumulator scratch resident across k.
    k = pl.program_id(1)

    @pl.when(k == 0)
    def _():
        acc_ref[...] = jnp.zeros_like(acc_ref)

    acc_ref[...] += _tile_ffn(x_ref, w1_ref, b1_ref, w2_ref, approximate)

    @pl.when(k == pl.num_programs(1) - 1)
    def _():
        o_ref[...] = (acc_ref[...] + b2_ref[...].astype(jnp.float32)).astype(o_ref.dtype)


def _round_up(n, m):
    return -(-n // m) * m


def _cdiv(a, b):
    return -(-a // b)


def _vmem_capacity_bytes():
    try:
        info = pltpu.get_tpu_info()
        cap = getattr(info, "vmem_capacity_bytes", None)
        if cap:
            return int(cap)
    except Exception:
        pass
    return 64 * 1024 * 1024  # conservative: v7x per-TensorCore VMEM


def feed_forward(x, w1, b1, w2, b2, *, block_m=512, block_k=None,
                 compute_dtype=jnp.bfloat16, approximate_gelu=False):
    """FeedForward forward pass (inference semantics; dropout p=0 elided).

    x: (..., dim).  w1, w2: (dim, dim) in PyTorch (out, in) layout (used as-is, no
    transpose copy).  b1, b2: (dim,).

    compute_dtype: dtype fed to the MXU (weights and activations); bf16 by default —
      halves the dominant weight HBM traffic and runs the MXU at full rate while
      accumulation stays f32.  Pass weights already cast (store bf16 at model init) to
      avoid any per-call cast; pass compute_dtype=None to keep the weights' own dtype.
    approximate_gelu: use tanh-approx GELU (EUP) instead of exact erf (VALU polynomial).
    """
    orig_shape = x.shape
    dim = orig_shape[-1]
    x2d = x.reshape(-1, dim)
    rows = x2d.shape[0]
    out_dtype = x.dtype

    w1 = jnp.asarray(w1)
    w2 = jnp.asarray(w2)
    if w1.shape != (dim, dim) or w2.shape != (dim, dim):
        raise ValueError("w1/w2 must be (dim, dim) in PyTorch (out, in) layout")
    if compute_dtype is not None and w1.dtype != jnp.dtype(compute_dtype):
        # Fallback cast; ideally the caller stores weights pre-cast (no per-call traffic).
        w1 = w1.astype(compute_dtype)
        w2 = w2.astype(compute_dtype)
    b1_2d = jnp.asarray(b1).reshape(1, dim).astype(jnp.float32)
    b2_2d = jnp.asarray(b2).reshape(1, dim).astype(jnp.float32)

    x_isz = jnp.dtype(x.dtype).itemsize
    w_isz = jnp.dtype(w1.dtype).itemsize
    o_isz = jnp.dtype(out_dtype).itemsize
    out_is_f32 = jnp.dtype(out_dtype) == jnp.dtype(jnp.float32)

    # Sublane packing per dtype: f32 -> 8 rows/vreg, bf16 -> 16, int8/fp8 -> 32.
    sublane = max(8, 32 // x_isz)

    # Row tile.
    bm = _round_up(min(block_m, _round_up(rows, sublane)), sublane)
    # Prefer >= 2 row tiles so the "parallel" axis can shard across v7x's 2 TensorCores,
    # but only when rows are large enough that re-streaming weights per tile is amortized.
    if rows >= 256 and _cdiv(rows, bm) < 2:
        bm = _round_up(_cdiv(rows, 2), sublane)

    cap = _vmem_capacity_bytes()
    budget = int(0.80 * cap)

    def use_single_buffer(bm_, bk_):
        # x / b2 keep the same block across the whole k loop: drop their second buffer
        # when it would actually waste meaningful VMEM (large-D case).
        return bk_ < dim and bm_ * dim * x_isz >= (1 << 20)

    def vmem_need(bm_, bk_):
        multi_k = bk_ < dim
        nbuf_const = 1 if use_single_buffer(bm_, bk_) else 2
        n = nbuf_const * bm_ * dim * x_isz              # x row tile
        n += 2 * bk_ * dim * w_isz                      # W1 row tile (double-buffered)
        n += 2 * dim * bk_ * w_isz                      # W2 column tile
        n += 2 * 8 * max(bk_, 128) * 4                  # b1 tile (sublane/lane padded)
        n += nbuf_const * 8 * max(dim, 128) * 4         # b2
        n += 2 * bm_ * dim * o_isz                      # output tile
        if multi_k and not out_is_f32:
            n += bm_ * dim * 4                          # f32 accumulator scratch
        return n

    if block_k is None:
        cands = sorted({c for c in (dim, 4096, 2048, 1024, 512, 256, 128)
                        if c <= dim and dim % c == 0}, reverse=True)
        while True:
            block_k = next((c for c in cands if vmem_need(bm, c) <= budget), None)
            if block_k is not None or bm <= sublane:
                break
            bm = _round_up(bm // 2, sublane)
        if block_k is None:
            block_k = cands[-1]
            # TODO(synk): dims with no 128-multiple divisor cannot tile finer than `dim`.
    if dim % block_k != 0:
        raise ValueError(f"dim={dim} must be a multiple of block_k={block_k}")

    num_k = dim // block_k
    rows_p = _round_up(rows, bm)
    if rows_p != rows:
        # Padded rows compute garbage (GELU(b1) @ W2.T + b2) and are sliced off below.
        x2d = jnp.pad(x2d, ((0, rows_p - rows), (0, 0)))
    grid = (rows_p // bm, num_k)

    single_buf = use_single_buffer(bm, block_k)

    def _const_spec(shape, index_map):
        if single_buf:
            return pl.BlockSpec(shape, index_map, pipeline_mode=pl.Buffered(1))
        return pl.BlockSpec(shape, index_map)

    in_specs = [
        _const_spec((bm, dim), lambda i, k: (i, 0)),           # x row tile (constant over k)
        pl.BlockSpec((block_k, dim), lambda i, k: (k, 0)),     # W1 rows  = hidden tile k
        pl.BlockSpec((1, block_k), lambda i, k: (0, k)),       # b1 tile
        pl.BlockSpec((dim, block_k), lambda i, k: (0, k)),     # W2 cols  = hidden tile k
        _const_spec((1, dim), lambda i, k: (0, 0)),            # b2 (constant)
    ]
    out_spec = pl.BlockSpec((bm, dim), lambda i, k: (i, 0))

    if num_k == 1:
        kernel = partial(_ffn_kernel_single, approximate=approximate_gelu)
        scratch = []
    elif out_is_f32:
        kernel = partial(_ffn_kernel_acc_out, approximate=approximate_gelu)
        scratch = []
    else:
        kernel = partial(_ffn_kernel_scratch, approximate=approximate_gelu)
        scratch = [pltpu.VMEM((bm, dim), jnp.float32)]

    need = vmem_need(bm, block_k)
    vmem_limit = int(min(max(int(1.3 * need), 32 * 1024 * 1024), int(0.92 * cap)))
    vmem_limit = max(vmem_limit, need)  # never request less than we actually use

    out = pl.pallas_call(
        kernel,
        out_shape=jax.ShapeDtypeStruct((rows_p, dim), out_dtype),
        grid_spec=pltpu.PrefetchScalarGridSpec(
            num_scalar_prefetch=0,
            grid=grid,
            in_specs=in_specs,
            out_specs=out_spec,
            scratch_shapes=scratch,
        ),
        compiler_params=pltpu.CompilerParams(
            dimension_semantics=("parallel", "arbitrary"),
            vmem_limit_bytes=vmem_limit,
        ),
    )(x2d, w1, b1_2d, w2, b2_2d)

    if rows_p != rows:
        out = out[:rows]
    return out.reshape(orig_shape)


def _init_linear_params(key, dim):
    """nn.Linear default init: U(-1/sqrt(fan_in), 1/sqrt(fan_in)); weight layout (out, in)."""
    kw, kb = jax.random.split(key)
    bound = 1.0 / math.sqrt(dim)
    w = jax.random.uniform(kw, (dim, dim), jnp.float32, -bound, bound)
    b = jax.random.uniform(kb, (dim,), jnp.float32, -bound, bound)
    return w, b


def _reference(x, w1, b1, w2, b2):
    """Exact-erf GELU FFN in f32 (weights upcast from whatever dtype they are stored in)."""
    xf = jnp.asarray(x, jnp.float32)
    w1f = jnp.asarray(w1, jnp.float32)
    w2f = jnp.asarray(w2, jnp.float32)
    h = jnp.matmul(xf, w1f.T, precision=lax.Precision.HIGHEST) + jnp.asarray(b1, jnp.float32)
    h = 0.5 * h * (1.0 + lax.erf(h * _INV_SQRT2))
    return jnp.matmul(h, w2f.T, precision=lax.Precision.HIGHEST) + jnp.asarray(b2, jnp.float32)


if __name__ == "__main__":
    key = jax.random.PRNGKey(0)
    k_x1, k_x2, k_x3, k_a, k_b, k_c, k_d = jax.random.split(key, 7)

    # --- Test 1: dim=128, f32 activations, bf16 weights (single hidden tile, no scratch) ---
    batch, seq, dim = 2, 8, 128
    x = jax.random.normal(k_x1, (batch, seq, dim), jnp.float32)
    w1, b1 = _init_linear_params(k_a, dim)
    w2, b2 = _init_linear_params(k_b, dim)
    # Weights stored in bf16 once (as a model would at init) — no per-call cast traffic.
    w1_bf, w2_bf = w1.astype(jnp.bfloat16), w2.astype(jnp.bfloat16)

    out = jax.block_until_ready(feed_forward(x, w1_bf, b1, w2_bf, b2))
    ref = _reference(x, w1_bf, b1, w2_bf, b2)
    assert out.shape == (batch, seq, dim)
    assert out.dtype == x.dtype
    assert jnp.allclose(out, ref, atol=3e-2, rtol=3e-2), "mismatch vs reference (dim=128)"

    # --- Test 2: dim=256, ragged rows, forced multi-k reduction (accumulate into f32 out) ---
    dim2 = 256
    w1b, b1b = _init_linear_params(k_c, dim2)
    w2b, b2b = _init_linear_params(k_d, dim2)
    w1b_bf, w2b_bf = w1b.astype(jnp.bfloat16), w2b.astype(jnp.bfloat16)
    x2 = jax.random.normal(k_x2, (1, 5, dim2), jnp.float32)
    out2 = jax.block_until_ready(feed_forward(x2, w1b_bf, b1b, w2b_bf, b2b, block_k=128))
    ref2 = _reference(x2, w1b_bf, b1b, w2b_bf, b2b)
    assert out2.shape == x2.shape
    assert jnp.allclose(out2, ref2, atol=3e-2, rtol=3e-2), "mismatch vs reference (multi-k)"

    # --- Test 3: bf16 activations, multi-k (f32 scratch-accumulator path) ---
    x3 = jax.random.normal(k_x3, (2, 16, dim2), jnp.bfloat16)
    out3 = jax.block_until_ready(feed_forward(x3, w1b_bf, b1b, w2b_bf, b2b, block_k=128))
    ref3 = _reference(x3, w1b_bf, b1b, w2b_bf, b2b)
    assert out3.dtype == jnp.bfloat16
    assert jnp.allclose(out3.astype(jnp.float32), ref3, atol=5e-2, rtol=5e-2), \
        "mismatch vs reference (bf16 activations)"

    print("KERNEL_OK")
</pallas_src>

<mosaic_0001>
module attributes {stable_mosaic.version = 11 : i64} {
  func.func @_ffn_kernel_single(%arg0: i32, %arg1: i32, %arg2: memref<16x128xf32, #tpu.memory_space<vmem>>, %arg3: memref<128x128xbf16, #tpu.memory_space<vmem>>, %arg4: memref<1x128xf32, #tpu.memory_space<vmem>>, %arg5: memref<128x128xbf16, #tpu.memory_space<vmem>>, %arg6: memref<1x128xf32, #tpu.memory_space<vmem>>, %arg7: memref<16x128xf32, #tpu.memory_space<vmem>>) attributes {dimension_semantics = [#tpu.dimension_semantics<parallel>, #tpu.dimension_semantics<arbitrary>], iteration_bounds = array<i64: 1, 1>, scalar_prefetch = 0 : i64, scratch_operands = 0 : i64, tpu.core_type = #tpu.core_type<tc>, window_params = [{transform_indices = @transform_0, window_bounds = array<i64: 16, 128>}, {transform_indices = @transform_1, window_bounds = array<i64: 128, 128>}, {transform_indices = @transform_2, window_bounds = array<i64: 1, 128>}, {transform_indices = @transform_3, window_bounds = array<i64: 128, 128>}, {pipeline_mode = #tpu.pipeline_mode<synchronous>, transform_indices = @transform_4, window_bounds = array<i64: 1, 128>}, {transform_indices = @transform_5, window_bounds = array<i64: 16, 128>}]} {
    %c0 = arith.constant 0 : index
    %c0_0 = arith.constant 0 : index
    %0 = vector.load %arg2[%c0, %c0_0] : memref<16x128xf32, #tpu.memory_space<vmem>>, vector<16x128xf32>
    %1 = arith.truncf %0 : vector<16x128xf32> to vector<16x128xbf16>
    %c0_1 = arith.constant 0 : index
    %c0_2 = arith.constant 0 : index
    %2 = vector.load %arg3[%c0_1, %c0_2] : memref<128x128xbf16, #tpu.memory_space<vmem>>, vector<128x128xbf16>
    %cst = arith.constant dense<0.000000e+00> : vector<16x128xf32>
    %3 = tpu.matmul %1, %2, %cst {dimension_numbers = #tpu.dot_dimension_numbers<[1], [1], [0], [0], [0, 0, 1, 0], [], []>} : vector<16x128xbf16>, vector<128x128xbf16>, vector<16x128xf32> -> vector<16x128xf32>
    %c0_3 = arith.constant 0 : index
    %c0_4 = arith.constant 0 : index
    %4 = vector.load %arg4[%c0_3, %c0_4] : memref<1x128xf32, #tpu.memory_space<vmem>>, vector<1x128xf32>
    %5 = vector.broadcast %4 : vector<1x128xf32> to vector<16x128xf32>
    %6 = arith.addf %3, %5 : vector<16x128xf32>
    %cst_5 = arith.constant 5.000000e-01 : f32
    %7 = vector.broadcast %cst_5 : f32 to vector<16x128xf32>
    %8 = arith.mulf %7, %6 : vector<16x128xf32>
    %cst_6 = arith.constant 0.707106769 : f32
    %9 = vector.broadcast %cst_6 : f32 to vector<16x128xf32>
    %10 = arith.mulf %6, %9 : vector<16x128xf32>
    %11 = math.erf %10 : vector<16x128xf32>
    %cst_7 = arith.constant 1.000000e+00 : f32
    %12 = vector.broadcast %cst_7 : f32 to vector<16x128xf32>
    %13 = arith.addf %12, %11 : vector<16x128xf32>
    %14 = arith.mulf %8, %13 : vector<16x128xf32>
    %15 = arith.truncf %14 : vector<16x128xf32> to vector<16x128xbf16>
    %c0_8 = arith.constant 0 : index
    %c0_9 = arith.constant 0 : index
    %16 = vector.load %arg5[%c0_8, %c0_9] : memref<128x128xbf16, #tpu.memory_space<vmem>>, vector<128x128xbf16>
    %cst_10 = arith.constant dense<0.000000e+00> : vector<16x128xf32>
    %17 = tpu.matmul %15, %16, %cst_10 {dimension_numbers = #tpu.dot_dimension_numbers<[1], [1], [0], [0], [0, 0, 1, 0], [], []>} : vector<16x128xbf16>, vector<128x128xbf16>, vector<16x128xf32> -> vector<16x128xf32>
    %c0_11 = arith.constant 0 : index
    %c0_12 = arith.constant 0 : index
    %18 = vector.load %arg6[%c0_11, %c0_12] : memref<1x128xf32, #tpu.memory_space<vmem>>, vector<1x128xf32>
    %19 = vector.broadcast %18 : vector<1x128xf32> to vector<16x128xf32>
    %20 = arith.addf %17, %19 : vector<16x128xf32>
    %c0_13 = arith.constant 0 : index
    %c0_14 = arith.constant 0 : index
    %21 = vector.load %arg7[%c0_13, %c0_14] : memref<16x128xf32, #tpu.memory_space<vmem>>, vector<16x128xf32>
    tpu.vector_store %arg7[%c0_13, %c0_14], %20 {strides = array<i32>} : memref<16x128xf32, #tpu.memory_space<vmem>>, vector<16x128xf32>,
    return
  }
  func.func @transform_0(%arg0: i32, %arg1: i32) -> (i32, i32) {
    %c0_i32 = arith.constant 0 : i32
    %c0_i32_0 = arith.constant 0 : i32
    return %arg0, %c0_i32 : i32, i32
  }
  func.func @transform_1(%arg0: i32, %arg1: i32) -> (i32, i32) {
    %c0_i32 = arith.constant 0 : i32
    %c0_i32_0 = arith.constant 0 : i32
    return %arg1, %c0_i32 : i32, i32
  }
  func.func @transform_2(%arg0: i32, %arg1: i32) -> (i32, i32) {
    %c0_i32 = arith.constant 0 : i32
    %c0_i32_0 = arith.constant 0 : i32
    return %c0_i32, %arg1 : i32, i32
  }
  func.func @transform_3(%arg0: i32, %arg1: i32) -> (i32, i32) {
    %c0_i32 = arith.constant 0 : i32
    %c0_i32_0 = arith.constant 0 : i32
    return %c0_i32, %arg1 : i32, i32
  }
  func.func @transform_4(%arg0: i32, %arg1: i32) -> (i32, i32) {
    %c0_i32 = arith.constant 0 : i32
    %c0_i32_0 = arith.constant 0 : i32
    %c0_i32_1 = arith.constant 0 : i32
    return %c0_i32, %c0_i32_0 : i32, i32
  }
  func.func @transform_5(%arg0: i32, %arg1: i32) -> (i32, i32) {
    %c0_i32 = arith.constant 0 : i32
    %c0_i32_0 = arith.constant 0 : i32
    return %arg0, %c0_i32 : i32, i32
  }
}

</mosaic_0001>

<llo_original>
// kernel: tpu_custom_call.1
$region0: #{tpu_custom_call.1}
  #allocation0 [shape = 'u32[]', space=smem, size = 0x4, offset = 0x4, fixed_abs, tag = 'smem constant byte address 0x4 - core index']
  #allocation1 [shape = 'u32[144,128]{1,0:T(1,128)}', space=vmem, size = 0x12000, scoped, tag = 'internal scratch']
  %s0 = inlined_call_operand.hbm [shape: f32[16,128], index: 0, kind: input, shape index: {}]
  %s1 = inlined_call_operand.hbm [shape: bf16[128,128], index: 1, kind: input, shape index: {}]
  %s2 = inlined_call_operand.vmem [shape: f32[1,128], index: 2, kind: input, shape index: {}]
  %s3 = inlined_call_operand.hbm [shape: bf16[128,128], index: 3, kind: input, shape index: {}]
  %s4 = inlined_call_operand.vmem [shape: f32[1,128], index: 4, kind: input, shape index: {}]
  %s5 = inlined_call_operand.hbm [shape: f32[16,128], index: 5, kind: output, shape index: {}]
  %s6 = sld [smem:[#allocation0]]
  $region42: #{tpu_custom_call.1} parent=0
    _
  %s8 = ssub.s32 1, %s6
  %s9 = scalar_select 0, %s8, %s6
  $region1: #{tpu_custom_call.1} parent=0
    #allocation2 [shape = 'u8[8192]{0}', space=vmem, size = 0x2000, scoped, tag = 'input window, operand 0, single buffered']
    #allocation3 [shape = 's32[1]{0}', space=sflag, size = 0x4, scoped, tag = 'scoped memory for tpu_custom_call.1']
    #allocation4 [shape = 's32[1]{0}', space=sflag, size = 0x4, scoped, tag = 'scoped memory for tpu_custom_call.1']
    #allocation5 [shape = 'u8[32768]{0}', space=vmem, size = 0x8000, scoped, tag = 'input window, operand 1, single buffered']
    #allocation6 [shape = 's32[1]{0}', space=sflag, size = 0x4, scoped, tag = 'scoped memory for tpu_custom_call.1']
    #allocation7 [shape = 'u8[32768]{0}', space=vmem, size = 0x8000, scoped, tag = 'input window, operand 3, single buffered']
    #allocation8 [shape = 'u8[8192]{0}', space=vmem, size = 0x2000, scoped, tag = 'output window, operand 0, single buffered']
    %10 = vsyncpa [#allocation3], 0
    %11 = vsyncpa [#allocation6], 0
    %12 = vsyncpa [#allocation4], 0
    // Predicated region
    $region2: #{tpu_custom_call.1} parent=1 // pred_check
      _
    $region3: #{tpu_custom_call.1} parent=1 // pred_check_branch
      %14 = sbr.rel (0) target = $region5
    $region4: #{tpu_custom_call.1} parent=1 // pred_region
      %s16 = ssub.s32 256, 256
      %17 = vsyncadd [#allocation3], %s16
      %s18 = sshll.u32 [#allocation2], 4
      %s19 = int_to_ptr.vmem [resolvable:$true] %s18
      %24 = dma.hbm_to_vmem [thread:$0]  %s0, 256, %s19, [#allocation3], 128, 128, 8
    $region5: #{tpu_custom_call.1} parent=1 // pred_fallthru
      _
    // Predicated region
    $region6: #{tpu_custom_call.1} parent=1 // pred_check
      _
    $region7: #{tpu_custom_call.1} parent=1 // pred_check_branch
      %26 = sbr.rel (0) target = $region9
    $region8: #{tpu_custom_call.1} parent=1 // pred_region
      %s28 = ssub.s32 1024, 1024
      %29 = vsyncadd [#allocation6], %s28
      %s30 = sshll.u32 [#allocation5], 4
      %s31 = int_to_ptr.vmem [resolvable:$true] %s30
      %36 = dma.hbm_to_vmem [thread:$0]  %s1, 1024, %s31, [#allocation6], 64, 64, 4
    $region9: #{tpu_custom_call.1} parent=1 // pred_fallthru
      _
    // Predicated region
    $region10: #{tpu_custom_call.1} parent=1 // pred_check
      _
    $region11: #{tpu_custom_call.1} parent=1 // pred_check_branch
      %38 = sbr.rel (0) target = $region13
    $region12: #{tpu_custom_call.1} parent=1 // pred_region
      _
    $region13: #{tpu_custom_call.1} parent=1 // pred_fallthru
      _
    // Predicated region
    $region14: #{tpu_custom_call.1} parent=1 // pred_check
      _
    $region15: #{tpu_custom_call.1} parent=1 // pred_check_branch
      %40 = sbr.rel (0) target = $region17
    $region16: #{tpu_custom_call.1} parent=1 // pred_region
      %s42 = ssub.s32 1024, 1024
      %43 = vsyncadd [#allocation6], %s42
      %s44 = sshll.u32 [#allocation7], 4
      %s45 = int_to_ptr.vmem [resolvable:$true] %s44
      %50 = dma.hbm_to_vmem [thread:$0]  %s3, 1024, %s45, [#allocation6], 64, 64, 4
    $region17: #{tpu_custom_call.1} parent=1 // pred_fallthru
      _
    // Predicated region
    $region18: #{tpu_custom_call.1} parent=1 // pred_check
      _
    $region19: #{tpu_custom_call.1} parent=1 // pred_check_branch
      %52 = sbr.rel (0) target = $region21
    $region20: #{tpu_custom_call.1} parent=1 // pred_region
      _
    $region21: #{tpu_custom_call.1} parent=1 // pred_fallthru
      _
    // Predicated region
    $region22: #{tpu_custom_call.1} parent=1 // pred_check
      _
    $region23: #{tpu_custom_call.1} parent=1 // pred_check_branch
      %54 = sbr.rel (0) target = $region25
    $region24: #{tpu_custom_call.1} parent=1 // pred_region
      %55 = dma.done [#allocation3], 256
    $region25: #{tpu_custom_call.1} parent=1 // pred_fallthru
      _
    // Predicated region
    $region26: #{tpu_custom_call.1} parent=1 // pred_check
      _
    $region27: #{tpu_custom_call.1} parent=1 // pred_check_branch
      %57 = sbr.rel (0) target = $region29
    $region28: #{tpu_custom_call.1} parent=1 // pred_region
      %58 = dma.done [#allocation6], 1024
    $region29: #{tpu_custom_call.1} parent=1 // pred_fallthru
      _
    // Predicated region
    $region30: #{tpu_custom_call.1} parent=1 // pred_check
      _
    $region31: #{tpu_custom_call.1} parent=1 // pred_check_branch
      %60 = sbr.rel (0) target = $region33
    $region32: #{tpu_custom_call.1} parent=1 // pred_region
      %61 = dma.done [#allocation6], 1024
    $region33: #{tpu_custom_call.1} parent=1 // pred_fallthru
      _
    %v63 = vld [vmem:[#allocation2] sm:$0xff]
    %v64 = vld [vmem:[#allocation2 + $0x8] sm:$0xff]
    %v65 = vpack.c.bf16 %v64, %v63
    %v66 = vld [vmem:[#allocation5] sm:$0xf]
    %v67 = vld [vmem:[#allocation5 + $0x4] sm:$0xf]
    %v68 = vld [vmem:[#allocation5 + $0x8] sm:$0xf]
    %v69 = vld [vmem:[#allocation5 + $0xc] sm:$0xf]
    %v70 = vld [vmem:[#allocation5 + $0x10] sm:$0xf]
    %v71 = vld [vmem:[#allocation5 + $0x14] sm:$0xf]
    %v72 = vld [vmem:[#allocation5 + $0x18] sm:$0xf]
    %v73 = vld [vmem:[#allocation5 + $0x1c] sm:$0xf]
    %v74 = vld [vmem:[#allocation5 + $0x20] sm:$0xf]
    %v75 = vld [vmem:[#allocation5 + $0x24] sm:$0xf]
    %v76 = vld [vmem:[#allocation5 + $0x28] sm:$0xf]
    %v77 = vld [vmem:[#allocation5 + $0x2c] sm:$0xf]
    %v78 = vld [vmem:[#allocation5 + $0x30] sm:$0xf]
    %v79 = vld [vmem:[#allocation5 + $0x34] sm:$0xf]
    %v80 = vld [vmem:[#allocation5 + $0x38] sm:$0xf]
    %v81 = vld [vmem:[#allocation5 + $0x3c] sm:$0xf]
    %v82 = vld [vmem:[%s2] sm:$0x1]
    %v84 = vlaneseq
    %v85 = vshrl.u32 %v84, 7
    %v86 = vsub.s32 0, %v85
    %v87 = vrot.slane %v82, %v86
    %v105 = vunpack.c.l.b16 %v66
    %v106 = vunpack.c.l.b16 %v67
    %v107 = vunpack.c.l.b16 %v68
    %v108 = vunpack.c.l.b16 %v69
    %v109 = vunpack.c.l.b16 %v70
    %v110 = vunpack.c.l.b16 %v71
    %v111 = vunpack.c.l.b16 %v72
    %v112 = vunpack.c.l.b16 %v73
    %v113 = vunpack.c.l.b16 %v74
    %v114 = vunpack.c.l.b16 %v75
    %v115 = vunpack.c.l.b16 %v76
    %v116 = vunpack.c.l.b16 %v77
    %v117 = vunpack.c.l.b16 %v78
    %v118 = vunpack.c.l.b16 %v79
    %v119 = vunpack.c.l.b16 %v80
    %v120 = vunpack.c.l.b16 %v81
    %v121 = vpack.c.b16 %v106, %v105
    %v122 = vpack.c.b16 %v108, %v107
    %v123 = vpack.c.b16 %v110, %v109
    %v124 = vpack.c.b16 %v112, %v111
    %v125 = vpack.c.b16 %v114, %v113
    %v126 = vpack.c.b16 %v116, %v115
    %v127 = vpack.c.b16 %v118, %v117
    %v128 = vpack.c.b16 %v120, %v119
    %137 = vmatprep.subr.bf16.mxu0 0
    %138 = vmatpush1.bf16.xpose.msra.mxu0 %v128
    %139 = vmatprep.subr.bf16.mxu0 0
    %140 = vmatpush1.bf16.xpose.msra.mxu0 %v127
    %141 = vmatprep.subr.bf16.mxu0 0
    %142 = vmatpush1.bf16.xpose.msra.mxu0 %v126
    %143 = vmatprep.subr.bf16.mxu0 0
    %144 = vmatpush1.bf16.xpose.msra.mxu0 %v125
    %145 = vmatprep.subr.bf16.mxu0 0
    %146 = vmatpush1.bf16.xpose.msra.mxu0 %v124
    %147 = vmatprep.subr.bf16.mxu0 0
    %148 = vmatpush1.bf16.xpose.msra.mxu0 %v123
    %149 = vmatprep.subr.bf16.mxu0 0
    %150 = vmatpush1.bf16.xpose.msra.mxu0 %v122
    %151 = vmatprep.subr.bf16.mxu0 0
    %152 = vmatpush1.bf16.xpose.msra.mxu0 %v121
    %153 = vmatprep.subr.bf16.mxu0 0
    %154 = vmatpush2.bf16.xpose.msra.mxu0 0
    %155 = vmatprep.subr.bf16.mxu0 0
    %156 = vmatpush2.bf16.xpose.msra.mxu0 0
    %157 = vmatprep.subr.bf16.mxu0 0
    %158 = vmatpush2.bf16.xpose.msra.mxu0 0
    %159 = vmatprep.subr.bf16.mxu0 0
    %160 = vmatpush2.bf16.xpose.msra.mxu0 0
    %161 = vmatprep.subr.bf16.mxu0 0
    %162 = vmatpush2.bf16.xpose.msra.mxu0 0
    %163 = vmatprep.subr.bf16.mxu0 0
    %164 = vmatpush2.bf16.xpose.msra.mxu0 0
    %165 = vmatprep.subr.bf16.mxu0 0
    %166 = vmatpush2.bf16.xpose.msra.mxu0 0
    %167 = vmatprep.subr.bf16.mxu0 0
    %168 = vmatpush2.bf16.xpose.msra.mxu0 0
    %169 = vmatprep.mubr.bf16.mxu0 0
    %170 = vmatmul.mubr.bf16.gmra.mxu0 %v65
    %v171 = vpop.f32.mrf.mxu0
    %v172 = vadd.f32 %v87, %v171
    %v173 = vpop.f32.mrf.mxu0
    %v174 = vpop.f32.mrf.mxu0
    %v175 = vadd.f32 %v87, %v174
    %v176 = vpop.f32.mrf.mxu0
    %177 = vdwg.mxu0
    %v178 = vmul.f32 %v172, 0.5
    %v179 = vmul.f32 %v175, 0.5
    %v180 = vmul.f32 %v172, 0.70710677
    %v181 = vmul.f32 %v175, 0.70710677
    %v182 = verf.f32.pop %v180
    %v183 = verf.f32.pop %v181
    %v184 = vadd.f32 %v182, 1.0
    %v185 = vadd.f32 %v183, 1.0
    %v186 = vmul.f32 %v178, %v184
    %v187 = vmul.f32 %v179, %v185
    %v188 = vpack.c.bf16 %v187, %v186
    %v189 = vld [vmem:[#allocation7] sm:$0xf]
    %v190 = vld [vmem:[#allocation7 + $0x4] sm:$0xf]
    %v191 = vld [vmem:[#allocation7 + $0x8] sm:$0xf]
    %v192 = vld [vmem:[#allocation7 + $0xc] sm:$0xf]
    %v193 = vld [vmem:[#allocation7 + $0x10] sm:$0xf]
    %v194 = vld [vmem:[#allocation7 + $0x14] sm:$0xf]
    %v195 = vld [vmem:[#allocation7 + $0x18] sm:$0xf]
    %v196 = vld [vmem:[#allocation7 + $0x1c] sm:$0xf]
    %v197 = vld [vmem:[#allocation7 + $0x20] sm:$0xf]
    %v198 = vld [vmem:[#allocation7 + $0x24] sm:$0xf]
    %v199 = vld [vmem:[#allocation7 + $0x28] sm:$0xf]
    %v200 = vld [vmem:[#allocation7 + $0x2c] sm:$0xf]
    %v201 = vld [vmem:[#allocation7 + $0x30] sm:$0xf]
    %v202 = vld [vmem:[#allocation7 + $0x34] sm:$0xf]
    %v203 = vld [vmem:[#allocation7 + $0x38] sm:$0xf]
    %v204 = vld [vmem:[#allocation7 + $0x3c] sm:$0xf]
    %v205 = vld [vmem:[%s4] sm:$0x1]
    %v207 = vlaneseq
    %v208 = vshrl.u32 %v207, 7
    %v209 = vsub.s32 0, %v208
    %v210 = vrot.slane %v205, %v209
    %v228 = vunpack.c.l.b16 %v189
    %v229 = vunpack.c.l.b16 %v190
    %v230 = vunpack.c.l.b16 %v191
    %v231 = vunpack.c.l.b16 %v192
    %v232 = vunpack.c.l.b16 %v193
    %v233 = vunpack.c.l.b16 %v194
    %v234 = vunpack.c.l.b16 %v195
    %v235 = vunpack.c.l.b16 %v196
    %v236 = vunpack.c.l.b16 %v197
    %v237 = vunpack.c.l.b16 %v198
    %v238 = vunpack.c.l.b16 %v199
    %v239 = vunpack.c.l.b16 %v200
    %v240 = vunpack.c.l.b16 %v201
    %v241 = vunpack.c.l.b16 %v202
    %v242 = vunpack.c.l.b16 %v203
    %v243 = vunpack.c.l.b16 %v204
    %v244 = vpack.c.b16 %v229, %v228
    %v245 = vpack.c.b16 %v231, %v230
    %v246 = vpack.c.b16 %v233, %v232
    %v247 = vpack.c.b16 %v235, %v234
    %v248 = vpack.c.b16 %v237, %v236
    %v249 = vpack.c.b16 %v239, %v238
    %v250 = vpack.c.b16 %v241, %v240
    %v251 = vpack.c.b16 %v243, %v242
    %260 = vmatprep.subr.bf16.mxu0 0
    %261 = vmatpush1.bf16.xpose.msra.mxu0 %v251
    %262 = vmatprep.subr.bf16.mxu0 0
    %263 = vmatpush1.bf16.xpose.msra.mxu0 %v250
    %264 = vmatprep.subr.bf16.mxu0 0
    %265 = vmatpush1.bf16.xpose.msra.mxu0 %v249
    %266 = vmatprep.subr.bf16.mxu0 0
    %267 = vmatpush1.bf16.xpose.msra.mxu0 %v248
    %268 = vmatprep.subr.bf16.mxu0 0
    %269 = vmatpush1.bf16.xpose.msra.mxu0 %v247
    %270 = vmatprep.subr.bf16.mxu0 0
    %271 = vmatpush1.bf16.xpose.msra.mxu0 %v246
    %272 = vmatprep.subr.bf16.mxu0 0
    %273 = vmatpush1.bf16.xpose.msra.mxu0 %v245
    %274 = vmatprep.subr.bf16.mxu0 0
    %275 = vmatpush1.bf16.xpose.msra.mxu0 %v244
    %276 = vmatprep.subr.bf16.mxu0 0
    %277 = vmatpush2.bf16.xpose.msra.mxu0 0
    %278 = vmatprep.subr.bf16.mxu0 0
    %279 = vmatpush2.bf16.xpose.msra.mxu0 0
    %280 = vmatprep.subr.bf16.mxu0 0
    %281 = vmatpush2.bf16.xpose.msra.mxu0 0
    %282 = vmatprep.subr.bf16.mxu0 0
    %283 = vmatpush2.bf16.xpose.msra.mxu0 0
    %284 = vmatprep.subr.bf16.mxu0 0
    %285 = vmatpush2.bf16.xpose.msra.mxu0 0
    %286 = vmatprep.subr.bf16.mxu0 0
    %287 = vmatpush2.bf16.xpose.msra.mxu0 0
    %288 = vmatprep.subr.bf16.mxu0 0
    %289 = vmatpush2.bf16.xpose.msra.mxu0 0
    %290 = vmatprep.subr.bf16.mxu0 0
    %291 = vmatpush2.bf16.xpose.msra.mxu0 0
    %292 = vmatprep.mubr.bf16.mxu0 0
    %293 = vmatmul.mubr.bf16.gmra.mxu0 %v188
    %v294 = vpop.f32.mrf.mxu0
    %v295 = vadd.f32 %v210, %v294
    %v296 = vpop.f32.mrf.mxu0
    %v297 = vpop.f32.mrf.mxu0
    %v298 = vadd.f32 %v210, %v297
    %v299 = vpop.f32.mrf.mxu0
    %300 = vdwg.mxu0
    %301 = vst [vmem:[#allocation8] sm:$0xff] %v295
    %302 = vst [vmem:[#allocation8 + $0x8] sm:$0xff] %v298
    // Predicated region
    $region34: #{tpu_custom_call.1} parent=1 // pred_check
      _
    $region35: #{tpu_custom_call.1} parent=1 // pred_check_branch
      %304 = sbr.rel (0) target = $region37
    $region36: #{tpu_custom_call.1} parent=1 // pred_region
      %s306 = ssub.s32 256, 256
      %307 = vsyncadd [#allocation4], %s306
      %s308 = sshll.u32 [#allocation8], 4
      %s309 = int_to_ptr.vmem [resolvable:$true] %s308
      %314 = dma.vmem_to_hbm [thread:$0]  %s309, 256, %s5, [#allocation4], 128, 128, 8
    $region37: #{tpu_custom_call.1} parent=1 // pred_fallthru
      _
    // Predicated region
    $region38: #{tpu_custom_call.1} parent=1 // pred_check
      _
    $region39: #{tpu_custom_call.1} parent=1 // pred_check_branch
      %316 = sbr.rel (0) target = $region41
    $region40: #{tpu_custom_call.1} parent=1 // pred_region
      %317 = dma.done [#allocation4], 256
    $region41: #{tpu_custom_call.1} parent=1 // pred_fallthru
      _
    %318 = vsyncpa [#allocation3], 1
    %319 = vsyncpa [#allocation6], 1
    %320 = vsyncpa [#allocation4], 1

</llo_original>
